<compile_context>
chip_gen: v6e
topology: v6e:2x2x1
jax: 0.10.0
libtpu: 0.0.40
codegen_flags: <defaults>
</compile_context>

<pallas_src>
import jax
import jax.numpy as jnp
from jax.experimental import pallas as pl
from jax.experimental.pallas import tpu as pltpu

SUBLANE = 8            # f32 sublanes per vreg
MAX_BM = 2048          # rows per grid step cap (v7x: bigger tiles amortize step overhead)
PALLAS_MIN_BATCH = 512 # below this the fused XLA path wins (fixed pallas_call cost)


def _round_up(n, m):
    return ((n + m - 1) // m) * m


def _pick_bm(batch):
    """Rows per grid step: >=2 steps for non-trivial batches (v7x 2-TC), cap at MAX_BM."""
    if batch <= SUBLANE:
        return batch                      # single full-extent block (always a legal block)
    half = -(-batch // 2)                 # ceil(batch / 2)
    return min(MAX_BM, _round_up(half, SUBLANE))


def linear_kernel(x_ref, wt_ref, b_ref, o_ref):
    # x_ref : (bm, Din)   input rows for this grid step, native dtype
    # wt_ref: (Din, Dout) pre-transposed weight, resident across the grid
    # b_ref : (1, Dout)   bias, resident
    # o_ref : (bm, Dout)  unpadded-minor-dim output block (no write amplification)
    x = x_ref[...].astype(jnp.float32)                       # in-kernel upcast
    y = jnp.dot(x, wt_ref[...], preferred_element_type=jnp.float32)  # MXU (idle otherwise)
    o_ref[...] = (y + b_ref[...]).astype(o_ref.dtype)


@jax.jit
def linear_pallas(x, w, b):
    """y = x @ w.T + b, matching torch.nn.Linear. x: (B, Din), w: (Dout, Din), b: (Dout,)."""
    batch, din = x.shape
    dout = w.shape[0]

    # One tiny (3x4) transpose in the wrapper; no padding of weight, bias, x, or output.
    wt = w.T.astype(jnp.float32)                  # (Din, Dout)
    bias = b.reshape(1, dout).astype(jnp.float32) # (1, Dout)

    bm = _pick_bm(batch)
    grid = (pl.cdiv(batch, bm),)                  # unpadded batch; boundary block is masked

    return pl.pallas_call(
        linear_kernel,
        out_shape=jax.ShapeDtypeStruct((batch, dout), x.dtype),
        grid=grid,
        in_specs=[
            pl.BlockSpec((bm, din), lambda i: (i, 0)),    # batch-tiled rows, native dtype
            pl.BlockSpec((din, dout), lambda i: (0, 0)),  # weight resident
            pl.BlockSpec((1, dout), lambda i: (0, 0)),    # bias resident
        ],
        out_specs=pl.BlockSpec((bm, dout), lambda i: (i, 0)),
        compiler_params=pltpu.CompilerParams(
            dimension_semantics=("parallel",)),           # shard batch across TCs (v7x)
    )(x, wt, bias)


@jax.jit
def _linear_xla(x, w, b):
    y = jnp.dot(x.astype(jnp.float32), w.T.astype(jnp.float32),
                preferred_element_type=jnp.float32) + b.astype(jnp.float32)
    return y.astype(x.dtype)


def simple_model_forward(x, w, b):
    """Production entry point: tiny batches go to fused XLA, large ones to Pallas."""
    if x.shape[0] < PALLAS_MIN_BATCH:
        return _linear_xla(x, w, b)
    return linear_pallas(x, w, b)


def init_params(key, input_dim=4, output_dim=3):
    # Deterministic init mimicking nn.Linear: U(-1/sqrt(fan_in), 1/sqrt(fan_in)).
    kw, kb = jax.random.split(key)
    bound = 1.0 / (input_dim ** 0.5)
    w = jax.random.uniform(kw, (output_dim, input_dim), jnp.float32, -bound, bound)
    b = jax.random.uniform(kb, (output_dim,), jnp.float32, -bound, bound)
    return w, b


if __name__ == "__main__":
    input_dim, output_dim, batch = 4, 3, 2
    key = jax.random.PRNGKey(0)
    kx, kp, kx2, kx3 = jax.random.split(key, 4)

    x = jax.random.normal(kx, (batch, input_dim), jnp.float32)
    w, b = init_params(kp, input_dim, output_dim)

    def ref_fn(xx):
        return xx @ w.T + b

    # 1) Module-sized input (batch=2): single-grid-step Pallas path.
    out = jax.block_until_ready(linear_pallas(x, w, b))
    assert out.shape == (batch, output_dim)
    assert out.dtype == x.dtype
    assert jnp.allclose(out, ref_fn(x), atol=1e-5, rtol=1e-5)

    # 2) Larger batch: 2-step "parallel" grid (exercises both v7x TensorCores), exact tiling.
    x_big = jax.random.normal(kx2, (272, input_dim), jnp.float32)
    out_big = jax.block_until_ready(linear_pallas(x_big, w, b))
    assert jnp.allclose(out_big, ref_fn(x_big), atol=1e-5, rtol=1e-5)

    # 3) Ragged batch: exercises the masked boundary block (no pre-padding of x).
    x_rag = jax.random.normal(kx3, (130, input_dim), jnp.float32)
    out_rag = jax.block_until_ready(linear_pallas(x_rag, w, b))
    assert jnp.allclose(out_rag, ref_fn(x_rag), atol=1e-5, rtol=1e-5)

    # 4) Routed entry point (small batch takes the fused-XLA fallback).
    out_routed = jax.block_until_ready(simple_model_forward(x, w, b))
    assert jnp.allclose(out_routed, ref_fn(x), atol=1e-5, rtol=1e-5)

    print("KERNEL_OK")
</pallas_src>

<mosaic_0001>
module attributes {stable_mosaic.version = 11 : i64} {
  func.func @linear_kernel(%arg0: i32, %arg1: memref<2x4xf32, #tpu.memory_space<vmem>>, %arg2: memref<4x3xf32, #tpu.memory_space<vmem>>, %arg3: memref<1x3xf32, #tpu.memory_space<vmem>>, %arg4: memref<2x3xf32, #tpu.memory_space<vmem>>) attributes {dimension_semantics = [#tpu.dimension_semantics<parallel>], iteration_bounds = array<i64: 1>, scalar_prefetch = 0 : i64, scratch_operands = 0 : i64, tpu.core_type = #tpu.core_type<tc>, window_params = [{transform_indices = @transform_0, window_bounds = array<i64: 2, 4>}, {pipeline_mode = #tpu.pipeline_mode<synchronous>, transform_indices = @transform_1, window_bounds = array<i64: 4, 3>}, {pipeline_mode = #tpu.pipeline_mode<synchronous>, transform_indices = @transform_2, window_bounds = array<i64: 1, 3>}, {transform_indices = @transform_3, window_bounds = array<i64: 2, 3>}]} {
    %c0 = arith.constant 0 : index
    %c0_0 = arith.constant 0 : index
    %0 = vector.load %arg1[%c0, %c0_0] : memref<2x4xf32, #tpu.memory_space<vmem>>, vector<2x4xf32>
    %c0_1 = arith.constant 0 : index
    %c0_2 = arith.constant 0 : index
    %1 = vector.load %arg2[%c0_1, %c0_2] : memref<4x3xf32, #tpu.memory_space<vmem>>, vector<4x3xf32>
    %cst = arith.constant dense<0.000000e+00> : vector<2x3xf32>
    %2 = tpu.matmul %0, %1, %cst {dimension_numbers = #tpu.dot_dimension_numbers<[1], [0], [0], [1], [0, 0, 1, 1], [], []>} : vector<2x4xf32>, vector<4x3xf32>, vector<2x3xf32> -> vector<2x3xf32>
    %c0_3 = arith.constant 0 : index
    %c0_4 = arith.constant 0 : index
    %3 = vector.load %arg3[%c0_3, %c0_4] : memref<1x3xf32, #tpu.memory_space<vmem>>, vector<1x3xf32>
    %4 = vector.broadcast %3 : vector<1x3xf32> to vector<2x3xf32>
    %5 = arith.addf %2, %4 : vector<2x3xf32>
    %c0_5 = arith.constant 0 : index
    %c0_6 = arith.constant 0 : index
    %6 = vector.load %arg4[%c0_5, %c0_6] : memref<2x3xf32, #tpu.memory_space<vmem>>, vector<2x3xf32>
    tpu.vector_store %arg4[%c0_5, %c0_6], %5 {strides = array<i32>} : memref<2x3xf32, #tpu.memory_space<vmem>>, vector<2x3xf32>,
    return
  }
  func.func @transform_0(%arg0: i32) -> (i32, i32) {
    %c0_i32 = arith.constant 0 : i32
    %c0_i32_0 = arith.constant 0 : i32
    return %arg0, %c0_i32 : i32, i32
  }
  func.func @transform_1(%arg0: i32) -> (i32, i32) {
    %c0_i32 = arith.constant 0 : i32
    %c0_i32_0 = arith.constant 0 : i32
    %c0_i32_1 = arith.constant 0 : i32
    return %c0_i32, %c0_i32_0 : i32, i32
  }
  func.func @transform_2(%arg0: i32) -> (i32, i32) {
    %c0_i32 = arith.constant 0 : i32
    %c0_i32_0 = arith.constant 0 : i32
    %c0_i32_1 = arith.constant 0 : i32
    return %c0_i32, %c0_i32_0 : i32, i32
  }
  func.func @transform_3(%arg0: i32) -> (i32, i32) {
    %c0_i32 = arith.constant 0 : i32
    %c0_i32_0 = arith.constant 0 : i32
    return %arg0, %c0_i32 : i32, i32
  }
}

</mosaic_0001>

<llo_original>
// kernel: linear_pallas.1
$region0: #{linear_pallas.1}
  #allocation0 [shape = 'u32[]', space=smem, size = 0x4, offset = 0x4, fixed_abs, tag = 'smem constant byte address 0x4 - core index']
  #allocation1 [shape = 'u32[144,128]{1,0:T(1,128)}', space=vmem, size = 0x12000, scoped, tag = 'internal scratch']
  %s0 = inlined_call_operand.vmem [shape: f32[2,4], index: 0, kind: input, shape index: {}]
  %s1 = inlined_call_operand.vmem [shape: f32[4,3], index: 1, kind: input, shape index: {}]
  %s2 = inlined_call_operand.vmem [shape: f32[1,3], index: 2, kind: input, shape index: {}]
  %s3 = inlined_call_operand.hbm [shape: f32[2,3], index: 3, kind: output, shape index: {}]
  %s4 = sld [smem:[#allocation0]]
  $region22: #{linear_pallas.1} parent=0
    _
  %s6 = ssub.s32 1, %s4
  %s7 = scalar_select 0, %s6, %s4
  $region1: #{linear_pallas.1} parent=0
    #allocation2 [shape = 'u8[1024]{0}', space=vmem, size = 0x400, scoped, tag = 'output window, operand 0, single buffered']
    #allocation3 [shape = 's32[1]{0}', space=sflag, size = 0x4, scoped, tag = 'scoped memory for linear_pallas.1']
    %8 = vsyncpa [#allocation3], 0
    // Predicated region
    $region2: #{linear_pallas.1} parent=1 // pred_check
      _
    $region3: #{linear_pallas.1} parent=1 // pred_check_branch
      %10 = sbr.rel (0) target = $region5
    $region4: #{linear_pallas.1} parent=1 // pred_region
      _
    $region5: #{linear_pallas.1} parent=1 // pred_fallthru
      _
    // Predicated region
    $region6: #{linear_pallas.1} parent=1 // pred_check
      _
    $region7: #{linear_pallas.1} parent=1 // pred_check_branch
      %12 = sbr.rel (0) target = $region9
    $region8: #{linear_pallas.1} parent=1 // pred_region
      _
    $region9: #{linear_pallas.1} parent=1 // pred_fallthru
      _
    // Predicated region
    $region10: #{linear_pallas.1} parent=1 // pred_check
      _
    $region11: #{linear_pallas.1} parent=1 // pred_check_branch
      %14 = sbr.rel (0) target = $region13
    $region12: #{linear_pallas.1} parent=1 // pred_region
      _
    $region13: #{linear_pallas.1} parent=1 // pred_fallthru
      _
    %v15 = vld [vmem:[%s0] sm:$0x3]
    %v16 = vld [vmem:[%s1] sm:$0xf]
    %v17 = vld [vmem:[%s2] sm:$0x1]
    %v19 = vlaneseq
    %v20 = vshrl.u32 %v19, 7
    %v21 = vsub.s32 0, %v20
    %v22 = vrot.slane %v17, %v21
    %vm24 = vcmask 31744
    %v26 = vsel %vm24, %v15, 0
    %vm28 = vcmask 1043456
    %v30 = vsel %vm28, %v16, 0
    %32 = vmatprep.subr.mxu0 0.0
    %33 = vmatpush1.msra.mxu0 0.0
    %34 = vmatprep.subr.mxu0 0.0
    %35 = vmatpush1.msra.mxu0 0.0
    %36 = vmatprep.subr.mxu0 0.0
    %37 = vmatpush1.msra.mxu0 0.0
    %38 = vmatprep.subr.mxu0 0.0
    %39 = vmatpush1.msra.mxu0 0.0
    %40 = vmatprep.subr.mxu0 0.0
    %41 = vmatpush1.msra.mxu0 0.0
    %42 = vmatprep.subr.mxu0 0.0
    %43 = vmatpush1.msra.mxu0 0.0
    %44 = vmatprep.subr.mxu0 0.0
    %45 = vmatpush1.msra.mxu0 0.0
    %46 = vmatprep.subr.mxu0 0.0
    %47 = vmatpush1.msra.mxu0 0.0
    %48 = vmatprep.subr.mxu0 0.0
    %49 = vmatpush1.msra.mxu0 0.0
    %50 = vmatprep.subr.mxu0 0.0
    %51 = vmatpush1.msra.mxu0 0.0
    %52 = vmatprep.subr.mxu0 0.0
    %53 = vmatpush1.msra.mxu0 0.0
    %54 = vmatprep.subr.mxu0 0.0
    %55 = vmatpush1.msra.mxu0 0.0
    %56 = vmatprep.subr.mxu0 0.0
    %57 = vmatpush1.msra.mxu0 0.0
    %58 = vmatprep.subr.mxu0 0.0
    %59 = vmatpush1.msra.mxu0 0.0
    %60 = vmatprep.subr.mxu0 0.0
    %61 = vmatpush1.msra.mxu0 0.0
    %62 = vmatprep.subr.mxu0 0.0
    %63 = vmatpush1.msra.mxu0 %v30
    %64 = vmatprep.subr.mxu0 0.0
    %65 = vmatpush2.msra.mxu0 0.0
    %66 = vmatprep.subr.mxu0 0.0
    %67 = vmatpush2.msra.mxu0 0.0
    %68 = vmatprep.subr.mxu0 0.0
    %69 = vmatpush2.msra.mxu0 0.0
    %70 = vmatprep.subr.mxu0 0.0
    %71 = vmatpush2.msra.mxu0 0.0
    %72 = vmatprep.subr.mxu0 0.0
    %73 = vmatpush2.msra.mxu0 0.0
    %74 = vmatprep.subr.mxu0 0.0
    %75 = vmatpush2.msra.mxu0 0.0
    %76 = vmatprep.subr.mxu0 0.0
    %77 = vmatpush2.msra.mxu0 0.0
    %78 = vmatprep.subr.mxu0 0.0
    %79 = vmatpush2.msra.mxu0 0.0
    %80 = vmatprep.subr.mxu0 0.0
    %81 = vmatpush2.msra.mxu0 0.0
    %82 = vmatprep.subr.mxu0 0.0
    %83 = vmatpush2.msra.mxu0 0.0
    %84 = vmatprep.subr.mxu0 0.0
    %85 = vmatpush2.msra.mxu0 0.0
    %86 = vmatprep.subr.mxu0 0.0
    %87 = vmatpush2.msra.mxu0 0.0
    %88 = vmatprep.subr.mxu0 0.0
    %89 = vmatpush2.msra.mxu0 0.0
    %90 = vmatprep.subr.mxu0 0.0
    %91 = vmatpush2.msra.mxu0 0.0
    %92 = vmatprep.subr.mxu0 0.0
    %93 = vmatpush2.msra.mxu0 0.0
    %94 = vmatprep.subr.mxu0 0.0
    %95 = vmatpush2.msra.mxu0 0.0
    %96 = vmatprep.mubr.f32.mxu0 0.0
    %97 = vmatmul.mubr.f32.gmra.mxu0 %v26
    %v98 = vpop.f32.mrf.mxu0
    %v99 = vadd.f32 %v22, %v98
    %v100 = vpop.f32.mrf.mxu0
    %101 = vdwg.mxu0
    %vm102 = vcmask 17408
    %103 = vst.msk [vmem:[#allocation2] sm:$0x3] %vm102, %v99
    // Predicated region
    $region14: #{linear_pallas.1} parent=1 // pred_check
      _
    $region15: #{linear_pallas.1} parent=1 // pred_check_branch
      %105 = sbr.rel (0) target = $region17
    $region16: #{linear_pallas.1} parent=1 // pred_region
      %s107 = ssub.s32 32, 32
      %108 = vsyncadd [#allocation3], %s107
      %s110 = sshll.u32 [#allocation2], 4
      %s111 = int_to_ptr.vmem [resolvable:$true] %s110
      %113 = dma.vmem_to_hbm [thread:$0]  %s111, 32, %s3, [#allocation3]
    $region17: #{linear_pallas.1} parent=1 // pred_fallthru
      _
    // Predicated region
    $region18: #{linear_pallas.1} parent=1 // pred_check
      _
    $region19: #{linear_pallas.1} parent=1 // pred_check_branch
      %115 = sbr.rel (0) target = $region21
    $region20: #{linear_pallas.1} parent=1 // pred_region
      %116 = dma.done [#allocation3], 32
    $region21: #{linear_pallas.1} parent=1 // pred_fallthru
      _
    %117 = vsyncpa [#allocation3], 1

</llo_original>
